<compile_context>
chip_gen: v5e
topology: v5e:2x2
jax: 0.10.0
libtpu: 0.0.40
codegen_flags: <defaults>
</compile_context>

<pallas_src>
import functools

import jax
import jax.numpy as jnp
from jax.experimental import pallas as pl
from jax.experimental.pallas import tpu as pltpu

HIDDEN = 128      # matches nn.Linear(obs_size, 128)
LANE = 128        # TPU vreg lane width
SUBLANE = 8       # f32 sublane group
MAX_BATCH_TILE = 256


def _round_up(n, m):
    return (n + m - 1) // m * m


def agent_mlp_kernel(x_ref, w1_ref, b1_ref, w2_ref, b2_ref, out_ref):
    # Hidden layer: Linear(obs_size, 128) + ReLU  (MXU matmul, f32 accumulate)
    h = jnp.dot(x_ref[...], w1_ref[...], preferred_element_type=jnp.float32)
    h = jnp.maximum(h + b1_ref[...], 0.0)        # bias + ReLU on the VPU
    # Output layer: Linear(128, n_act_padded)    (lane-dense, 128-wide store)
    o = jnp.dot(h, w2_ref[...], preferred_element_type=jnp.float32)
    out_ref[...] = (o + b2_ref[...]).astype(out_ref.dtype)
    # TODO(synk): optionally fuse argmax(logits) here for action selection to
    # save a second launch; kept out to preserve the module's logits output.


@jax.jit
def agent_forward(x, w1, b1, w2, b2):
    """x: [B, obs_size] f32 -> logits [B, n_act] f32."""
    batch, obs = x.shape
    hidden, n_act = w2.shape
    assert w1.shape == (obs, hidden)

    # --- padding to TPU-friendly shapes (zero padding, exact same math) ---
    k_pad = _round_up(max(obs, SUBLANE), SUBLANE)       # K -> multiple of 8
    n_pad = _round_up(max(n_act, LANE), LANE)           # N -> multiple of 128
    b_min = _round_up(batch, SUBLANE)                   # batch -> multiple of 8
    tb = min(MAX_BATCH_TILE, b_min)                     # batch tile (mult of 8)
    b_pad = _round_up(b_min, tb)

    xp = jnp.zeros((b_pad, k_pad), jnp.float32).at[:batch, :obs].set(x)
    w1p = jnp.zeros((k_pad, hidden), jnp.float32).at[:obs, :].set(w1)
    b1p = jnp.asarray(b1, jnp.float32).reshape(1, hidden)
    w2p = jnp.zeros((hidden, n_pad), jnp.float32).at[:, :n_act].set(w2)
    b2p = jnp.zeros((1, n_pad), jnp.float32).at[:, :n_act].set(
        jnp.asarray(b2, jnp.float32).reshape(1, n_act))

    grid = (b_pad // tb,)

    out_padded = pl.pallas_call(
        agent_mlp_kernel,
        out_shape=jax.ShapeDtypeStruct((b_pad, n_pad), jnp.float32),
        grid=grid,
        in_specs=[
            pl.BlockSpec((tb, k_pad), lambda i: (i, 0)),       # x: tiled over batch
            pl.BlockSpec((k_pad, hidden), lambda i: (0, 0)),   # w1: resident
            pl.BlockSpec((1, hidden), lambda i: (0, 0)),       # b1: resident
            pl.BlockSpec((hidden, n_pad), lambda i: (0, 0)),   # w2: resident
            pl.BlockSpec((1, n_pad), lambda i: (0, 0)),        # b2: resident
        ],
        out_specs=pl.BlockSpec((tb, n_pad), lambda i: (i, 0)),
        compiler_params=pltpu.CompilerParams(
            dimension_semantics=("parallel",),
        ),
    )(xp, w1p, b1p, w2p, b2p)

    # Slice off the zero padding with plain XLA (cheap, outside the kernel).
    return out_padded[:batch, :n_act]


def init_agent_params(key, obs_size, n_act, hidden=HIDDEN):
    """Deterministic init mirroring torch.nn.Linear default (uniform +/- 1/sqrt(fan_in))."""
    k1, k2, k3, k4 = jax.random.split(key, 4)
    bound1 = 1.0 / jnp.sqrt(jnp.float32(obs_size))
    bound2 = 1.0 / jnp.sqrt(jnp.float32(hidden))
    w1 = jax.random.uniform(k1, (obs_size, hidden), jnp.float32, -bound1, bound1)
    b1 = jax.random.uniform(k2, (1, hidden), jnp.float32, -bound1, bound1)
    w2 = jax.random.uniform(k3, (hidden, n_act), jnp.float32, -bound2, bound2)
    b2 = jax.random.uniform(k4, (1, n_act), jnp.float32, -bound2, bound2)
    return w1, b1, w2, b2


if __name__ == "__main__":
    # CartPole-like sizes: obs_size=4, n_act=2; small batch.
    obs_size, n_act, batch = 4, 2, 8

    key = jax.random.PRNGKey(0)
    kx, kp = jax.random.split(key)
    x = jax.random.normal(kx, (batch, obs_size), jnp.float32)
    w1, b1, w2, b2 = init_agent_params(kp, obs_size, n_act)

    out = agent_forward(x, w1, b1, w2, b2)
    out = jax.block_until_ready(out)

    # Pure-JAX reference check of forward semantics.
    ref = jnp.maximum(x @ w1 + b1, 0.0) @ w2 + b2
    assert out.shape == (batch, n_act)
    assert jnp.allclose(out, ref, atol=1e-5, rtol=1e-5)

    # Also exercise a larger (multi-tile) batch to check the grid path.
    xb = jax.random.normal(kx, (513, obs_size), jnp.float32)
    outb = jax.block_until_ready(agent_forward(xb, w1, b1, w2, b2))
    refb = jnp.maximum(xb @ w1 + b1, 0.0) @ w2 + b2
    assert outb.shape == (513, n_act)
    assert jnp.allclose(outb, refb, atol=1e-5, rtol=1e-5)

    print("KERNEL_OK")
</pallas_src>

<mosaic_0001>
module attributes {stable_mosaic.version = 11 : i64} {
  func.func @agent_mlp_kernel(%arg0: i32, %arg1: memref<8x8xf32, #tpu.memory_space<vmem>>, %arg2: memref<8x128xf32, #tpu.memory_space<vmem>>, %arg3: memref<1x128xf32, #tpu.memory_space<vmem>>, %arg4: memref<128x128xf32, #tpu.memory_space<vmem>>, %arg5: memref<1x128xf32, #tpu.memory_space<vmem>>, %arg6: memref<8x128xf32, #tpu.memory_space<vmem>>) attributes {dimension_semantics = [#tpu.dimension_semantics<parallel>], iteration_bounds = array<i64: 1>, scalar_prefetch = 0 : i64, scratch_operands = 0 : i64, tpu.core_type = #tpu.core_type<tc>, window_params = [{transform_indices = @transform_0, window_bounds = array<i64: 8, 8>}, {pipeline_mode = #tpu.pipeline_mode<synchronous>, transform_indices = @transform_1, window_bounds = array<i64: 8, 128>}, {pipeline_mode = #tpu.pipeline_mode<synchronous>, transform_indices = @transform_2, window_bounds = array<i64: 1, 128>}, {pipeline_mode = #tpu.pipeline_mode<synchronous>, transform_indices = @transform_3, window_bounds = array<i64: 128, 128>}, {pipeline_mode = #tpu.pipeline_mode<synchronous>, transform_indices = @transform_4, window_bounds = array<i64: 1, 128>}, {transform_indices = @transform_5, window_bounds = array<i64: 8, 128>}]} {
    %c0 = arith.constant 0 : index
    %c0_0 = arith.constant 0 : index
    %0 = vector.load %arg1[%c0, %c0_0] : memref<8x8xf32, #tpu.memory_space<vmem>>, vector<8x8xf32>
    %c0_1 = arith.constant 0 : index
    %c0_2 = arith.constant 0 : index
    %1 = vector.load %arg2[%c0_1, %c0_2] : memref<8x128xf32, #tpu.memory_space<vmem>>, vector<8x128xf32>
    %cst = arith.constant dense<0.000000e+00> : vector<8x128xf32>
    %2 = tpu.matmul %0, %1, %cst {dimension_numbers = #tpu.dot_dimension_numbers<[1], [0], [0], [1], [0, 0, 1, 1], [], []>} : vector<8x8xf32>, vector<8x128xf32>, vector<8x128xf32> -> vector<8x128xf32>
    %c0_3 = arith.constant 0 : index
    %c0_4 = arith.constant 0 : index
    %3 = vector.load %arg3[%c0_3, %c0_4] : memref<1x128xf32, #tpu.memory_space<vmem>>, vector<1x128xf32>
    %4 = vector.broadcast %3 : vector<1x128xf32> to vector<8x128xf32>
    %5 = arith.addf %2, %4 : vector<8x128xf32>
    %cst_5 = arith.constant 0.000000e+00 : f32
    %6 = vector.broadcast %cst_5 : f32 to vector<8x128xf32>
    %7 = arith.maximumf %5, %6 : vector<8x128xf32>
    %c0_6 = arith.constant 0 : index
    %c0_7 = arith.constant 0 : index
    %8 = vector.load %arg4[%c0_6, %c0_7] : memref<128x128xf32, #tpu.memory_space<vmem>>, vector<128x128xf32>
    %cst_8 = arith.constant dense<0.000000e+00> : vector<8x128xf32>
    %9 = tpu.matmul %7, %8, %cst_8 {dimension_numbers = #tpu.dot_dimension_numbers<[1], [0], [0], [1], [0, 0, 1, 1], [], []>} : vector<8x128xf32>, vector<128x128xf32>, vector<8x128xf32> -> vector<8x128xf32>
    %c0_9 = arith.constant 0 : index
    %c0_10 = arith.constant 0 : index
    %10 = vector.load %arg5[%c0_9, %c0_10] : memref<1x128xf32, #tpu.memory_space<vmem>>, vector<1x128xf32>
    %11 = vector.broadcast %10 : vector<1x128xf32> to vector<8x128xf32>
    %12 = arith.addf %9, %11 : vector<8x128xf32>
    %c0_11 = arith.constant 0 : index
    %c0_12 = arith.constant 0 : index
    %13 = vector.load %arg6[%c0_11, %c0_12] : memref<8x128xf32, #tpu.memory_space<vmem>>, vector<8x128xf32>
    tpu.vector_store %arg6[%c0_11, %c0_12], %12 {strides = array<i32>} : memref<8x128xf32, #tpu.memory_space<vmem>>, vector<8x128xf32>,
    return
  }
  func.func @transform_0(%arg0: i32) -> (i32, i32) {
    %c0_i32 = arith.constant 0 : i32
    %c0_i32_0 = arith.constant 0 : i32
    return %arg0, %c0_i32 : i32, i32
  }
  func.func @transform_1(%arg0: i32) -> (i32, i32) {
    %c0_i32 = arith.constant 0 : i32
    %c0_i32_0 = arith.constant 0 : i32
    %c0_i32_1 = arith.constant 0 : i32
    return %c0_i32, %c0_i32_0 : i32, i32
  }
  func.func @transform_2(%arg0: i32) -> (i32, i32) {
    %c0_i32 = arith.constant 0 : i32
    %c0_i32_0 = arith.constant 0 : i32
    %c0_i32_1 = arith.constant 0 : i32
    return %c0_i32, %c0_i32_0 : i32, i32
  }
  func.func @transform_3(%arg0: i32) -> (i32, i32) {
    %c0_i32 = arith.constant 0 : i32
    %c0_i32_0 = arith.constant 0 : i32
    %c0_i32_1 = arith.constant 0 : i32
    return %c0_i32, %c0_i32_0 : i32, i32
  }
  func.func @transform_4(%arg0: i32) -> (i32, i32) {
    %c0_i32 = arith.constant 0 : i32
    %c0_i32_0 = arith.constant 0 : i32
    %c0_i32_1 = arith.constant 0 : i32
    return %c0_i32, %c0_i32_0 : i32, i32
  }
  func.func @transform_5(%arg0: i32) -> (i32, i32) {
    %c0_i32 = arith.constant 0 : i32
    %c0_i32_0 = arith.constant 0 : i32
    return %arg0, %c0_i32 : i32, i32
  }
}

</mosaic_0001>

<llo_original>
// kernel: agent_forward.1
$region0: #{agent_forward.1}
  #allocation0 [shape = 'u32[]', space=smem, size = 0x4, offset = 0x4, fixed_abs, tag = 'smem constant byte address 0x4 - core index']
  #allocation1 [shape = 'u32[72,128]{1,0:T(1,128)}', space=vmem, size = 0x9000, scoped, tag = 'internal scratch']
  %s0 = inlined_call_operand.vmem [shape: f32[8,8], index: 0, kind: input, shape index: {}]
  %s1 = inlined_call_operand.vmem [shape: f32[8,128], index: 1, kind: input, shape index: {}]
  %s2 = inlined_call_operand.vmem [shape: f32[1,128], index: 2, kind: input, shape index: {}]
  %s3 = inlined_call_operand.vmem [shape: f32[128,128], index: 3, kind: input, shape index: {}]
  %s4 = inlined_call_operand.vmem [shape: f32[1,128], index: 4, kind: input, shape index: {}]
  %s5 = inlined_call_operand.vmem [shape: f32[8,128], index: 5, kind: output, shape index: {}]
  %s6 = sld [smem:[#allocation0]]
  $region30: #{agent_forward.1} parent=0
    _
  %s8 = ssub.s32 1, %s6
  %s9 = scalar_select 0, %s8, %s6
  // Predicated region
  $region2: #{agent_forward.1} parent=0 // pred_check
    _
  $region3: #{agent_forward.1} parent=0 // pred_check_branch
    %11 = sbr.rel (0) target = $region5
  $region4: #{agent_forward.1} parent=0 // pred_region
    _
  $region5: #{agent_forward.1} parent=0 // pred_fallthru
    _
  // Predicated region
  $region6: #{agent_forward.1} parent=0 // pred_check
    _
  $region7: #{agent_forward.1} parent=0 // pred_check_branch
    %13 = sbr.rel (0) target = $region9
  $region8: #{agent_forward.1} parent=0 // pred_region
    _
  $region9: #{agent_forward.1} parent=0 // pred_fallthru
    _
  // Predicated region
  $region10: #{agent_forward.1} parent=0 // pred_check
    _
  $region11: #{agent_forward.1} parent=0 // pred_check_branch
    %15 = sbr.rel (0) target = $region13
  $region12: #{agent_forward.1} parent=0 // pred_region
    _
  $region13: #{agent_forward.1} parent=0 // pred_fallthru
    _
  // Predicated region
  $region14: #{agent_forward.1} parent=0 // pred_check
    _
  $region15: #{agent_forward.1} parent=0 // pred_check_branch
    %17 = sbr.rel (0) target = $region17
  $region16: #{agent_forward.1} parent=0 // pred_region
    _
  $region17: #{agent_forward.1} parent=0 // pred_fallthru
    _
  // Predicated region
  $region18: #{agent_forward.1} parent=0 // pred_check
    _
  $region19: #{agent_forward.1} parent=0 // pred_check_branch
    %19 = sbr.rel (0) target = $region21
  $region20: #{agent_forward.1} parent=0 // pred_region
    _
  $region21: #{agent_forward.1} parent=0 // pred_fallthru
    _
  %v20 = vld [vmem:[%s0] sm:$0xff]
  %v21 = vld [vmem:[%s1] sm:$0xff]
  %v22 = vld [vmem:[%s2] sm:$0x1]
  %v24 = vperm.slane %v22, 0
  %vm26 = vcmask 64512
  %v28 = vsel %vm26, %v20, 0
  %30 = vmatpush.msra.mxu0 0.0
  %31 = vmatpush.msra.mxu0 0.0
  %32 = vmatpush.msra.mxu0 0.0
  %33 = vmatpush.msra.mxu0 0.0
  %34 = vmatpush.msra.mxu0 0.0
  %35 = vmatpush.msra.mxu0 0.0
  %36 = vmatpush.msra.mxu0 0.0
  %37 = vmatpush.msra.mxu0 0.0
  %38 = vmatpush.msra.mxu0 0.0
  %39 = vmatpush.msra.mxu0 0.0
  %40 = vmatpush.msra.mxu0 0.0
  %41 = vmatpush.msra.mxu0 0.0
  %42 = vmatpush.msra.mxu0 0.0
  %43 = vmatpush.msra.mxu0 0.0
  %44 = vmatpush.msra.mxu0 0.0
  %45 = vmatpush.msra.mxu0 %v21
  %46 = vmatmul.f32.gmra.mxu0 %v28
  %v47 = vpop.f32.mrf.mxu0
  %v48 = vadd.f32 %v24, %v47
  %49 = vdwg.mxu0
  %v50 = vmax.f32 %v48, 0.0
  %v51 = vld [vmem:[%s3] sm:$0xff]
  %v52 = vld [vmem:[%s3 + $0x8] sm:$0xff]
  %v53 = vld [vmem:[%s3 + $0x10] sm:$0xff]
  %v54 = vld [vmem:[%s3 + $0x18] sm:$0xff]
  %v55 = vld [vmem:[%s3 + $0x20] sm:$0xff]
  %v56 = vld [vmem:[%s3 + $0x28] sm:$0xff]
  %v57 = vld [vmem:[%s3 + $0x30] sm:$0xff]
  %v58 = vld [vmem:[%s3 + $0x38] sm:$0xff]
  %v59 = vld [vmem:[%s3 + $0x40] sm:$0xff]
  %v60 = vld [vmem:[%s3 + $0x48] sm:$0xff]
  %v61 = vld [vmem:[%s3 + $0x50] sm:$0xff]
  %v62 = vld [vmem:[%s3 + $0x58] sm:$0xff]
  %v63 = vld [vmem:[%s3 + $0x60] sm:$0xff]
  %v64 = vld [vmem:[%s3 + $0x68] sm:$0xff]
  %v65 = vld [vmem:[%s3 + $0x70] sm:$0xff]
  %v66 = vld [vmem:[%s3 + $0x78] sm:$0xff]
  %v67 = vld [vmem:[%s4] sm:$0x1]
  %v69 = vperm.slane %v67, 0
  %71 = vmatpush.msra.mxu0 %v66
  %72 = vmatpush.msra.mxu0 %v65
  %73 = vmatpush.msra.mxu0 %v64
  %74 = vmatpush.msra.mxu0 %v63
  %75 = vmatpush.msra.mxu0 %v62
  %76 = vmatpush.msra.mxu0 %v61
  %77 = vmatpush.msra.mxu0 %v60
  %78 = vmatpush.msra.mxu0 %v59
  %79 = vmatpush.msra.mxu0 %v58
  %80 = vmatpush.msra.mxu0 %v57
  %81 = vmatpush.msra.mxu0 %v56
  %82 = vmatpush.msra.mxu0 %v55
  %83 = vmatpush.msra.mxu0 %v54
  %84 = vmatpush.msra.mxu0 %v53
  %85 = vmatpush.msra.mxu0 %v52
  %86 = vmatpush.msra.mxu0 %v51
  %87 = vmatmul.f32.gmra.mxu0 %v50
  %v88 = vpop.f32.mrf.mxu0
  %v89 = vadd.f32 %v69, %v88
  %90 = vdwg.mxu0
  %91 = vst [vmem:[%s5] sm:$0xff] %v89
  // Predicated region
  $region22: #{agent_forward.1} parent=0 // pred_check
    _
  $region23: #{agent_forward.1} parent=0 // pred_check_branch
    %93 = sbr.rel (0) target = $region25
  $region24: #{agent_forward.1} parent=0 // pred_region
    _
  $region25: #{agent_forward.1} parent=0 // pred_fallthru
    _
  // Predicated region
  $region26: #{agent_forward.1} parent=0 // pred_check
    _
  $region27: #{agent_forward.1} parent=0 // pred_check_branch
    %95 = sbr.rel (0) target = $region29
  $region28: #{agent_forward.1} parent=0 // pred_region
    _
  $region29: #{agent_forward.1} parent=0 // pred_fallthru
    _

</llo_original>
